<compile_context>
chip_gen: v7x
topology: tpu7x:2x2x1
jax: 0.10.0
libtpu: 0.0.40
codegen_flags: <defaults>
</compile_context>

<pallas_src>
import functools

import jax
import jax.numpy as jnp
from jax.experimental import pallas as pl
from jax.experimental.pallas import tpu as pltpu

_LANE = 128     # lane width: last dim of every tile
_SUBLANE = 8    # f32 sublane packing: second-to-last dim multiple


def _round_up(x, m):
    return ((x + m - 1) // m) * m


def _sigmoid(x):
    # exp on the EUP, approx reciprocal (vrcp) also on the EUP -> VALU slot stays free.
    return pl.reciprocal(1.0 + jnp.exp(-x), approx=True)


def _dqnn_fused_kernel(x_ref, w_ref, b_ref, o_ref, *, num_layers, dot_dtype):
    """Whole MLP forward, fully VMEM-resident.

    x_ref: [Bp, F]    padded activations
    w_ref: [L, F, F]  padded, pre-transposed weights (w[l] maps layer-l in -> out)
    b_ref: [L, 1, F]  padded biases
    o_ref: [Bp, F]    padded output (real values live in [:batch, :output_nodes])
    """
    h = x_ref[...]
    for l in range(num_layers):          # static unroll: matches PyTorch Sequential order
        if l > 0:
            h = _sigmoid(h)               # Sigmoid before every layer except the first
        w = w_ref[l]
        if dot_dtype != jnp.float32:
            h = h.astype(dot_dtype)
            w = w.astype(dot_dtype)
        h = jnp.dot(h, w, preferred_element_type=jnp.float32) + b_ref[l]
    o_ref[...] = h


def _pad2(a, rows, cols):
    r, c = a.shape
    return jnp.pad(a, ((0, rows - r), (0, cols - c)))


def dqnn_forward(x, params, *, dot_dtype=jnp.float32):
    """x: [batch, input_nodes]; params: list of (w [in,out], b [1,out]).
    Returns [batch, output_nodes]."""
    batch, in_dim = x.shape
    out_dim = params[-1][0].shape[1]
    num_layers = len(params)

    # One common padded feature width F: all layer dims fit after padding, so every padded
    # weight is [F, F] and the whole stack is a single rectangular VMEM input.
    feat_max = max([in_dim] + [w.shape[1] for w, _ in params])
    F = _round_up(feat_max, _LANE)
    Bp = _round_up(max(batch, _SUBLANE), _SUBLANE)

    x_p = _pad2(x.astype(jnp.float32), Bp, F)
    w_p = jnp.stack([_pad2(w.astype(jnp.float32), F, F) for w, _ in params])  # [L, F, F]
    b_p = jnp.stack([_pad2(b.astype(jnp.float32), 1, F) for _, b in params])  # [L, 1, F]

    kernel = functools.partial(_dqnn_fused_kernel,
                               num_layers=num_layers, dot_dtype=dot_dtype)
    out_p = pl.pallas_call(
        kernel,
        out_shape=jax.ShapeDtypeStruct((Bp, F), jnp.float32),
        in_specs=[
            pl.BlockSpec(memory_space=pltpu.MemorySpace.VMEM),
            pl.BlockSpec(memory_space=pltpu.MemorySpace.VMEM),
            pl.BlockSpec(memory_space=pltpu.MemorySpace.VMEM),
        ],
        out_specs=pl.BlockSpec(memory_space=pltpu.MemorySpace.VMEM),
    )(x_p, w_p, b_p)
    return out_p[:batch, :out_dim]


def init_dqnn_params(key, input_nodes, output_nodes, num_hid_layers, num_neurons):
    """PyTorch-Linear-style init: U(-1/sqrt(fan_in), 1/sqrt(fan_in)).
    Returns list of (w, b) with w already transposed to [in, out]."""
    dims = [(input_nodes, num_neurons)]
    dims += [(num_neurons, num_neurons)] * num_hid_layers
    dims += [(num_neurons, output_nodes)]
    params = []
    for (fan_in, fan_out) in dims:
        key, kw, kb = jax.random.split(key, 3)
        bound = 1.0 / jnp.sqrt(jnp.float32(fan_in))
        w = jax.random.uniform(kw, (fan_in, fan_out), jnp.float32, -bound, bound)
        b = jax.random.uniform(kb, (1, fan_out), jnp.float32, -bound, bound)
        params.append((w, b))
    return params


def dqnn_ref(x, params):
    """Pure-JAX reference identical to the PyTorch Sequential."""
    h = x @ params[0][0] + params[0][1]
    for w, b in params[1:]:
        h = jax.nn.sigmoid(h) @ w + b
    return h


if __name__ == "__main__":
    # Shapes consistent with the module: DQnn(inputNodeNum=16, outputNodeNum=4,
    # num_hid_layers=2, num_neurons=32), batch=2.
    batch = 2
    input_nodes = 16
    output_nodes = 4
    num_hid_layers = 2
    num_neurons = 32

    key = jax.random.PRNGKey(0)
    key, kx = jax.random.split(key)
    x = jax.random.normal(kx, (batch, input_nodes), jnp.float32)

    params = init_dqnn_params(key, input_nodes, output_nodes, num_hid_layers, num_neurons)

    out = dqnn_forward(x, params)          # default: f32 matmul (use jnp.bfloat16 on v6e/v7x)
    out = jax.block_until_ready(out)

    ref = dqnn_ref(x, params)
    assert out.shape == (batch, output_nodes)
    # Tolerance loosened slightly vs. pure-f32: sigmoid uses approx (EUP vrcp) reciprocal.
    assert jnp.allclose(out, ref, atol=1e-2, rtol=1e-2), (out, ref)

    print("KERNEL_OK")
</pallas_src>

<mosaic_0001>
module attributes {stable_mosaic.version = 11 : i64} {
  func.func @_dqnn_fused_kernel(%arg0: memref<8x128xf32, #tpu.memory_space<vmem>>, %arg1: memref<4x128x128xf32, #tpu.memory_space<vmem>>, %arg2: memref<4x1x128xf32, #tpu.memory_space<vmem>>, %arg3: memref<8x128xf32, #tpu.memory_space<vmem>>) attributes {dimension_semantics = [], scalar_prefetch = 0 : i64, scratch_operands = 0 : i64, tpu.core_type = #tpu.core_type<tc>} {
    %c0 = arith.constant 0 : index
    %c0_0 = arith.constant 0 : index
    %0 = vector.load %arg0[%c0, %c0_0] : memref<8x128xf32, #tpu.memory_space<vmem>>, vector<8x128xf32>
    %c0_1 = arith.constant 0 : index
    %c0_2 = arith.constant 0 : index
    %c0_3 = arith.constant 0 : index
    %1 = vector.load %arg1[%c0_1, %c0_2, %c0_3] : memref<4x128x128xf32, #tpu.memory_space<vmem>>, vector<1x128x128xf32>
    %2 = vector.shape_cast %1 : vector<1x128x128xf32> to vector<128x128xf32>
    %cst = arith.constant dense<0.000000e+00> : vector<8x128xf32>
    %3 = tpu.matmul %0, %2, %cst {dimension_numbers = #tpu.dot_dimension_numbers<[1], [0], [0], [1], [0, 0, 1, 1], [], []>} : vector<8x128xf32>, vector<128x128xf32>, vector<8x128xf32> -> vector<8x128xf32>
    %c0_4 = arith.constant 0 : index
    %c0_5 = arith.constant 0 : index
    %c0_6 = arith.constant 0 : index
    %4 = vector.load %arg2[%c0_4, %c0_5, %c0_6] : memref<4x1x128xf32, #tpu.memory_space<vmem>>, vector<1x1x128xf32>
    %5 = vector.shape_cast %4 : vector<1x1x128xf32> to vector<1x128xf32>
    %6 = vector.broadcast %5 : vector<1x128xf32> to vector<8x128xf32>
    %7 = arith.addf %3, %6 : vector<8x128xf32>
    %cst_7 = arith.constant 0.000000e+00 : f32
    %8 = vector.broadcast %cst_7 : f32 to vector<8x128xf32>
    %9 = arith.subf %8, %7 : vector<8x128xf32>
    %10 = math.exp %9 : vector<8x128xf32>
    %cst_8 = arith.constant 1.000000e+00 : f32
    %11 = vector.broadcast %cst_8 : f32 to vector<8x128xf32>
    %12 = arith.addf %11, %10 : vector<8x128xf32>
    %13 = tpu.reciprocal %12 {approx = true} : vector<8x128xf32> -> vector<8x128xf32>
    %c1 = arith.constant 1 : index
    %c0_9 = arith.constant 0 : index
    %c0_10 = arith.constant 0 : index
    %14 = vector.load %arg1[%c1, %c0_9, %c0_10] : memref<4x128x128xf32, #tpu.memory_space<vmem>>, vector<1x128x128xf32>
    %15 = vector.shape_cast %14 : vector<1x128x128xf32> to vector<128x128xf32>
    %cst_11 = arith.constant dense<0.000000e+00> : vector<8x128xf32>
    %16 = tpu.matmul %13, %15, %cst_11 {dimension_numbers = #tpu.dot_dimension_numbers<[1], [0], [0], [1], [0, 0, 1, 1], [], []>} : vector<8x128xf32>, vector<128x128xf32>, vector<8x128xf32> -> vector<8x128xf32>
    %c1_12 = arith.constant 1 : index
    %c0_13 = arith.constant 0 : index
    %c0_14 = arith.constant 0 : index
    %17 = vector.load %arg2[%c1_12, %c0_13, %c0_14] : memref<4x1x128xf32, #tpu.memory_space<vmem>>, vector<1x1x128xf32>
    %18 = vector.shape_cast %17 : vector<1x1x128xf32> to vector<1x128xf32>
    %19 = vector.broadcast %18 : vector<1x128xf32> to vector<8x128xf32>
    %20 = arith.addf %16, %19 : vector<8x128xf32>
    %cst_15 = arith.constant 0.000000e+00 : f32
    %21 = vector.broadcast %cst_15 : f32 to vector<8x128xf32>
    %22 = arith.subf %21, %20 : vector<8x128xf32>
    %23 = math.exp %22 : vector<8x128xf32>
    %cst_16 = arith.constant 1.000000e+00 : f32
    %24 = vector.broadcast %cst_16 : f32 to vector<8x128xf32>
    %25 = arith.addf %24, %23 : vector<8x128xf32>
    %26 = tpu.reciprocal %25 {approx = true} : vector<8x128xf32> -> vector<8x128xf32>
    %c2 = arith.constant 2 : index
    %c0_17 = arith.constant 0 : index
    %c0_18 = arith.constant 0 : index
    %27 = vector.load %arg1[%c2, %c0_17, %c0_18] : memref<4x128x128xf32, #tpu.memory_space<vmem>>, vector<1x128x128xf32>
    %28 = vector.shape_cast %27 : vector<1x128x128xf32> to vector<128x128xf32>
    %cst_19 = arith.constant dense<0.000000e+00> : vector<8x128xf32>
    %29 = tpu.matmul %26, %28, %cst_19 {dimension_numbers = #tpu.dot_dimension_numbers<[1], [0], [0], [1], [0, 0, 1, 1], [], []>} : vector<8x128xf32>, vector<128x128xf32>, vector<8x128xf32> -> vector<8x128xf32>
    %c2_20 = arith.constant 2 : index
    %c0_21 = arith.constant 0 : index
    %c0_22 = arith.constant 0 : index
    %30 = vector.load %arg2[%c2_20, %c0_21, %c0_22] : memref<4x1x128xf32, #tpu.memory_space<vmem>>, vector<1x1x128xf32>
    %31 = vector.shape_cast %30 : vector<1x1x128xf32> to vector<1x128xf32>
    %32 = vector.broadcast %31 : vector<1x128xf32> to vector<8x128xf32>
    %33 = arith.addf %29, %32 : vector<8x128xf32>
    %cst_23 = arith.constant 0.000000e+00 : f32
    %34 = vector.broadcast %cst_23 : f32 to vector<8x128xf32>
    %35 = arith.subf %34, %33 : vector<8x128xf32>
    %36 = math.exp %35 : vector<8x128xf32>
    %cst_24 = arith.constant 1.000000e+00 : f32
    %37 = vector.broadcast %cst_24 : f32 to vector<8x128xf32>
    %38 = arith.addf %37, %36 : vector<8x128xf32>
    %39 = tpu.reciprocal %38 {approx = true} : vector<8x128xf32> -> vector<8x128xf32>
    %c3 = arith.constant 3 : index
    %c0_25 = arith.constant 0 : index
    %c0_26 = arith.constant 0 : index
    %40 = vector.load %arg1[%c3, %c0_25, %c0_26] : memref<4x128x128xf32, #tpu.memory_space<vmem>>, vector<1x128x128xf32>
    %41 = vector.shape_cast %40 : vector<1x128x128xf32> to vector<128x128xf32>
    %cst_27 = arith.constant dense<0.000000e+00> : vector<8x128xf32>
    %42 = tpu.matmul %39, %41, %cst_27 {dimension_numbers = #tpu.dot_dimension_numbers<[1], [0], [0], [1], [0, 0, 1, 1], [], []>} : vector<8x128xf32>, vector<128x128xf32>, vector<8x128xf32> -> vector<8x128xf32>
    %c3_28 = arith.constant 3 : index
    %c0_29 = arith.constant 0 : index
    %c0_30 = arith.constant 0 : index
    %43 = vector.load %arg2[%c3_28, %c0_29, %c0_30] : memref<4x1x128xf32, #tpu.memory_space<vmem>>, vector<1x1x128xf32>
    %44 = vector.shape_cast %43 : vector<1x1x128xf32> to vector<1x128xf32>
    %45 = vector.broadcast %44 : vector<1x128xf32> to vector<8x128xf32>
    %46 = arith.addf %42, %45 : vector<8x128xf32>
    %c0_31 = arith.constant 0 : index
    %c0_32 = arith.constant 0 : index
    %47 = vector.load %arg3[%c0_31, %c0_32] : memref<8x128xf32, #tpu.memory_space<vmem>>, vector<8x128xf32>
    tpu.vector_store %arg3[%c0_31, %c0_32], %46 {strides = array<i32>} : memref<8x128xf32, #tpu.memory_space<vmem>>, vector<8x128xf32>,
    return
  }
}

</mosaic_0001>

<llo_original>
// kernel: tpu_custom_call.1
$region0: #{tpu_custom_call.1}
  #allocation0 [shape = 'u32[]', space=smem, size = 0x4, offset = 0x4, fixed_abs, tag = 'smem constant byte address 0x4 - core index']
  #allocation1 [shape = 'u32[144,128]{1,0:T(1,128)}', space=vmem, size = 0x12000, scoped, tag = 'internal scratch']
  %s0 = inlined_call_operand.hbm [shape: f32[8,128], index: 0, kind: input, shape index: {}]
  %s1 = inlined_call_operand.hbm [shape: f32[4,128,128], index: 1, kind: input, shape index: {}]
  %s2 = inlined_call_operand.vmem [shape: f32[4,1,128], index: 2, kind: input, shape index: {}]
  %s3 = inlined_call_operand.hbm [shape: f32[8,128], index: 3, kind: output, shape index: {}]
  %s4 = sld [smem:[#allocation0]]
  $region30: #{tpu_custom_call.1} parent=0
    _
  %s6 = ssub.s32 1, %s4
  %s7 = scalar_select 0, %s6, %s4
  $region1: #{tpu_custom_call.1} parent=0
    #allocation2 [shape = 'u8[4096]{0}', space=vmem, size = 0x1000, scoped, tag = 'input window, operand 0, single buffered']
    #allocation3 [shape = 's32[1]{0}', space=sflag, size = 0x4, scoped, tag = 'scoped memory for tpu_custom_call.1']
    #allocation4 [shape = 's32[1]{0}', space=sflag, size = 0x4, scoped, tag = 'scoped memory for tpu_custom_call.1']
    #allocation5 [shape = 'u8[262144]{0}', space=vmem, size = 0x40000, scoped, tag = 'input window, operand 1, single buffered']
    #allocation6 [shape = 's32[1]{0}', space=sflag, size = 0x4, scoped, tag = 'scoped memory for tpu_custom_call.1']
    #allocation7 [shape = 'u8[4096]{0}', space=vmem, size = 0x1000, scoped, tag = 'output window, operand 0, single buffered']
    %8 = vsyncpa [#allocation3], 0
    %9 = vsyncpa [#allocation6], 0
    %10 = vsyncpa [#allocation4], 0
    // Predicated region
    $region2: #{tpu_custom_call.1} parent=1 // pred_check
      _
    $region3: #{tpu_custom_call.1} parent=1 // pred_check_branch
      %12 = sbr.rel (0) target = $region5
    $region4: #{tpu_custom_call.1} parent=1 // pred_region
      %s14 = ssub.s32 128, 128
      %15 = vsyncadd [#allocation3], %s14
      %s17 = sshll.u32 [#allocation2], 4
      %s18 = int_to_ptr.vmem [resolvable:$true] %s17
      %20 = dma.hbm_to_vmem [thread:$0]  %s0, 128, %s18, [#allocation3]
    $region5: #{tpu_custom_call.1} parent=1 // pred_fallthru
      _
    // Predicated region
    $region6: #{tpu_custom_call.1} parent=1 // pred_check
      _
    $region7: #{tpu_custom_call.1} parent=1 // pred_check_branch
      %22 = sbr.rel (0) target = $region9
    $region8: #{tpu_custom_call.1} parent=1 // pred_region
      %s24 = ssub.s32 8192, 8192
      %25 = vsyncadd [#allocation6], %s24
      %s26 = sshll.u32 [#allocation5], 4
      %s27 = int_to_ptr.vmem [resolvable:$true] %s26
      %32 = dma.hbm_to_vmem [thread:$0]  %s1, 8192, %s27, [#allocation6], 128, 128, 8
    $region9: #{tpu_custom_call.1} parent=1 // pred_fallthru
      _
    // Predicated region
    $region10: #{tpu_custom_call.1} parent=1 // pred_check
      _
    $region11: #{tpu_custom_call.1} parent=1 // pred_check_branch
      %34 = sbr.rel (0) target = $region13
    $region12: #{tpu_custom_call.1} parent=1 // pred_region
      _
    $region13: #{tpu_custom_call.1} parent=1 // pred_fallthru
      _
    // Predicated region
    $region14: #{tpu_custom_call.1} parent=1 // pred_check
      _
    $region15: #{tpu_custom_call.1} parent=1 // pred_check_branch
      %36 = sbr.rel (0) target = $region17
    $region16: #{tpu_custom_call.1} parent=1 // pred_region
      %37 = dma.done [#allocation3], 128
    $region17: #{tpu_custom_call.1} parent=1 // pred_fallthru
      _
    // Predicated region
    $region18: #{tpu_custom_call.1} parent=1 // pred_check
      _
    $region19: #{tpu_custom_call.1} parent=1 // pred_check_branch
      %39 = sbr.rel (0) target = $region21
    $region20: #{tpu_custom_call.1} parent=1 // pred_region
      %40 = dma.done [#allocation6], 8192
    $region21: #{tpu_custom_call.1} parent=1 // pred_fallthru
      _
    %v41 = vld [vmem:[#allocation2] sm:$0xff]
    %v42 = vld [vmem:[#allocation5] sm:$0xff]
    %v43 = vld [vmem:[#allocation5 + $0x8] sm:$0xff]
    %v44 = vld [vmem:[#allocation5 + $0x10] sm:$0xff]
    %v45 = vld [vmem:[#allocation5 + $0x18] sm:$0xff]
    %v46 = vld [vmem:[#allocation5 + $0x20] sm:$0xff]
    %v47 = vld [vmem:[#allocation5 + $0x28] sm:$0xff]
    %v48 = vld [vmem:[#allocation5 + $0x30] sm:$0xff]
    %v49 = vld [vmem:[#allocation5 + $0x38] sm:$0xff]
    %v50 = vld [vmem:[#allocation5 + $0x40] sm:$0xff]
    %v51 = vld [vmem:[#allocation5 + $0x48] sm:$0xff]
    %v52 = vld [vmem:[#allocation5 + $0x50] sm:$0xff]
    %v53 = vld [vmem:[#allocation5 + $0x58] sm:$0xff]
    %v54 = vld [vmem:[#allocation5 + $0x60] sm:$0xff]
    %v55 = vld [vmem:[#allocation5 + $0x68] sm:$0xff]
    %v56 = vld [vmem:[#allocation5 + $0x70] sm:$0xff]
    %v57 = vld [vmem:[#allocation5 + $0x78] sm:$0xff]
    %v58 = vld [vmem:[%s2] sm:$0x1]
    %v60 = vlaneseq
    %v61 = vshrl.u32 %v60, 7
    %v62 = vsub.s32 0, %v61
    %v63 = vrot.slane %v58, %v62
    %65 = vmatprep.subr.mxu0 0.0
    %66 = vmatpush1.msra.mxu0 %v42
    %67 = vmatprep.subr.mxu0 0.0
    %68 = vmatpush1.msra.mxu0 %v43
    %69 = vmatprep.subr.mxu0 0.0
    %70 = vmatpush1.msra.mxu0 %v44
    %71 = vmatprep.subr.mxu0 0.0
    %72 = vmatpush1.msra.mxu0 %v45
    %73 = vmatprep.subr.mxu0 0.0
    %74 = vmatpush1.msra.mxu0 %v46
    %75 = vmatprep.subr.mxu0 0.0
    %76 = vmatpush1.msra.mxu0 %v47
    %77 = vmatprep.subr.mxu0 0.0
    %78 = vmatpush1.msra.mxu0 %v48
    %79 = vmatprep.subr.mxu0 0.0
    %80 = vmatpush1.msra.mxu0 %v49
    %81 = vmatprep.subr.mxu0 0.0
    %82 = vmatpush1.msra.mxu0 %v50
    %83 = vmatprep.subr.mxu0 0.0
    %84 = vmatpush1.msra.mxu0 %v51
    %85 = vmatprep.subr.mxu0 0.0
    %86 = vmatpush1.msra.mxu0 %v52
    %87 = vmatprep.subr.mxu0 0.0
    %88 = vmatpush1.msra.mxu0 %v53
    %89 = vmatprep.subr.mxu0 0.0
    %90 = vmatpush1.msra.mxu0 %v54
    %91 = vmatprep.subr.mxu0 0.0
    %92 = vmatpush1.msra.mxu0 %v55
    %93 = vmatprep.subr.mxu0 0.0
    %94 = vmatpush1.msra.mxu0 %v56
    %95 = vmatprep.subr.mxu0 0.0
    %96 = vmatpush1.msra.mxu0 %v57
    %97 = vmatprep.subr.mxu0 0.0
    %98 = vmatpush1.msra.mxu0 0.0
    %99 = vmatprep.subr.mxu0 0.0
    %100 = vmatpush1.msra.mxu0 0.0
    %101 = vmatprep.subr.mxu0 0.0
    %102 = vmatpush1.msra.mxu0 0.0
    %103 = vmatprep.subr.mxu0 0.0
    %104 = vmatpush1.msra.mxu0 0.0
    %105 = vmatprep.subr.mxu0 0.0
    %106 = vmatpush1.msra.mxu0 0.0
    %107 = vmatprep.subr.mxu0 0.0
    %108 = vmatpush1.msra.mxu0 0.0
    %109 = vmatprep.subr.mxu0 0.0
    %110 = vmatpush1.msra.mxu0 0.0
    %111 = vmatprep.subr.mxu0 0.0
    %112 = vmatpush1.msra.mxu0 0.0
    %113 = vmatprep.subr.mxu0 0.0
    %114 = vmatpush1.msra.mxu0 0.0
    %115 = vmatprep.subr.mxu0 0.0
    %116 = vmatpush1.msra.mxu0 0.0
    %117 = vmatprep.subr.mxu0 0.0
    %118 = vmatpush1.msra.mxu0 0.0
    %119 = vmatprep.subr.mxu0 0.0
    %120 = vmatpush1.msra.mxu0 0.0
    %121 = vmatprep.subr.mxu0 0.0
    %122 = vmatpush1.msra.mxu0 0.0
    %123 = vmatprep.subr.mxu0 0.0
    %124 = vmatpush1.msra.mxu0 0.0
    %125 = vmatprep.subr.mxu0 0.0
    %126 = vmatpush1.msra.mxu0 0.0
    %127 = vmatprep.subr.mxu0 0.0
    %128 = vmatpush1.msra.mxu0 0.0
    %129 = vmatprep.mubr.f32.mxu0 0.0
    %130 = vmatmul.mubr.f32.gmra.mrb[0].mxu0 %v41
    %v131 = vpop.f32.mrb[0].mxu0
    %v132 = vadd.f32 %v63, %v131
    %v133 = vpop.f32.mrb[0].mxu0
    %134 = vdwg.mxu0
    %v135 = vsub.f32 0.0, %v132
    %v136 = vmul.f32 %v135, 1.442695
    %v137 = vpow.pop %v136
    %v138 = vadd.f32 %v137, 1.0
    %v139 = vrcp.pop %v138
    %s140 = scalar_lea.vmem [#allocation5], 128
    %v141 = vld [vmem:[%s140] sm:$0xff]
    %v142 = vld [vmem:[%s140 + $0x8] sm:$0xff]
    %v143 = vld [vmem:[%s140 + $0x10] sm:$0xff]
    %v144 = vld [vmem:[%s140 + $0x18] sm:$0xff]
    %v145 = vld [vmem:[%s140 + $0x20] sm:$0xff]
    %v146 = vld [vmem:[%s140 + $0x28] sm:$0xff]
    %v147 = vld [vmem:[%s140 + $0x30] sm:$0xff]
    %v148 = vld [vmem:[%s140 + $0x38] sm:$0xff]
    %v149 = vld [vmem:[%s140 + $0x40] sm:$0xff]
    %v150 = vld [vmem:[%s140 + $0x48] sm:$0xff]
    %v151 = vld [vmem:[%s140 + $0x50] sm:$0xff]
    %v152 = vld [vmem:[%s140 + $0x58] sm:$0xff]
    %v153 = vld [vmem:[%s140 + $0x60] sm:$0xff]
    %v154 = vld [vmem:[%s140 + $0x68] sm:$0xff]
    %v155 = vld [vmem:[%s140 + $0x70] sm:$0xff]
    %v156 = vld [vmem:[%s140 + $0x78] sm:$0xff]
    %s157 = scalar_lea.vmem %s2, 1
    %v158 = vld [vmem:[%s157] sm:$0x1]
    %v160 = vlaneseq
    %v161 = vshrl.u32 %v160, 7
    %v162 = vsub.s32 0, %v161
    %v163 = vrot.slane %v158, %v162
    %165 = vmatprep.subr.mxu0 0.0
    %166 = vmatpush1.msra.mxu0 %v141
    %167 = vmatprep.subr.mxu0 0.0
    %168 = vmatpush1.msra.mxu0 %v142
    %169 = vmatprep.subr.mxu0 0.0
    %170 = vmatpush1.msra.mxu0 %v143
    %171 = vmatprep.subr.mxu0 0.0
    %172 = vmatpush1.msra.mxu0 %v144
    %173 = vmatprep.subr.mxu0 0.0
    %174 = vmatpush1.msra.mxu0 %v145
    %175 = vmatprep.subr.mxu0 0.0
    %176 = vmatpush1.msra.mxu0 %v146
    %177 = vmatprep.subr.mxu0 0.0
    %178 = vmatpush1.msra.mxu0 %v147
    %179 = vmatprep.subr.mxu0 0.0
    %180 = vmatpush1.msra.mxu0 %v148
    %181 = vmatprep.subr.mxu0 0.0
    %182 = vmatpush1.msra.mxu0 %v149
    %183 = vmatprep.subr.mxu0 0.0
    %184 = vmatpush1.msra.mxu0 %v150
    %185 = vmatprep.subr.mxu0 0.0
    %186 = vmatpush1.msra.mxu0 %v151
    %187 = vmatprep.subr.mxu0 0.0
    %188 = vmatpush1.msra.mxu0 %v152
    %189 = vmatprep.subr.mxu0 0.0
    %190 = vmatpush1.msra.mxu0 %v153
    %191 = vmatprep.subr.mxu0 0.0
    %192 = vmatpush1.msra.mxu0 %v154
    %193 = vmatprep.subr.mxu0 0.0
    %194 = vmatpush1.msra.mxu0 %v155
    %195 = vmatprep.subr.mxu0 0.0
    %196 = vmatpush1.msra.mxu0 %v156
    %197 = vmatprep.subr.mxu0 0.0
    %198 = vmatpush1.msra.mxu0 0.0
    %199 = vmatprep.subr.mxu0 0.0
    %200 = vmatpush1.msra.mxu0 0.0
    %201 = vmatprep.subr.mxu0 0.0
    %202 = vmatpush1.msra.mxu0 0.0
    %203 = vmatprep.subr.mxu0 0.0
    %204 = vmatpush1.msra.mxu0 0.0
    %205 = vmatprep.subr.mxu0 0.0
    %206 = vmatpush1.msra.mxu0 0.0
    %207 = vmatprep.subr.mxu0 0.0
    %208 = vmatpush1.msra.mxu0 0.0
    %209 = vmatprep.subr.mxu0 0.0
    %210 = vmatpush1.msra.mxu0 0.0
    %211 = vmatprep.subr.mxu0 0.0
    %212 = vmatpush1.msra.mxu0 0.0
    %213 = vmatprep.subr.mxu0 0.0
    %214 = vmatpush1.msra.mxu0 0.0
    %215 = vmatprep.subr.mxu0 0.0
    %216 = vmatpush1.msra.mxu0 0.0
    %217 = vmatprep.subr.mxu0 0.0
    %218 = vmatpush1.msra.mxu0 0.0
    %219 = vmatprep.subr.mxu0 0.0
    %220 = vmatpush1.msra.mxu0 0.0
    %221 = vmatprep.subr.mxu0 0.0
    %222 = vmatpush1.msra.mxu0 0.0
    %223 = vmatprep.subr.mxu0 0.0
    %224 = vmatpush1.msra.mxu0 0.0
    %225 = vmatprep.subr.mxu0 0.0
    %226 = vmatpush1.msra.mxu0 0.0
    %227 = vmatprep.subr.mxu0 0.0
    %228 = vmatpush1.msra.mxu0 0.0
    %229 = vmatprep.mubr.f32.mxu0 0.0
    %230 = vmatmul.mubr.f32.gmra.mrb[0].mxu0 %v139
    %v231 = vpop.f32.mrb[0].mxu0
    %v232 = vadd.f32 %v163, %v231
    %v233 = vpop.f32.mrb[0].mxu0
    %234 = vdwg.mxu0
    %v235 = vsub.f32 0.0, %v232
    %v236 = vmul.f32 %v235, 1.442695
    %v237 = vpow.pop %v236
    %v238 = vadd.f32 %v237, 1.0
    %v239 = vrcp.pop %v238
    %s240 = scalar_lea.vmem [#allocation5], 256
    %v241 = vld [vmem:[%s240] sm:$0xff]
    %v242 = vld [vmem:[%s240 + $0x8] sm:$0xff]
    %v243 = vld [vmem:[%s240 + $0x10] sm:$0xff]
    %v244 = vld [vmem:[%s240 + $0x18] sm:$0xff]
    %v245 = vld [vmem:[%s240 + $0x20] sm:$0xff]
    %v246 = vld [vmem:[%s240 + $0x28] sm:$0xff]
    %v247 = vld [vmem:[%s240 + $0x30] sm:$0xff]
    %v248 = vld [vmem:[%s240 + $0x38] sm:$0xff]
    %v249 = vld [vmem:[%s240 + $0x40] sm:$0xff]
    %v250 = vld [vmem:[%s240 + $0x48] sm:$0xff]
    %v251 = vld [vmem:[%s240 + $0x50] sm:$0xff]
    %v252 = vld [vmem:[%s240 + $0x58] sm:$0xff]
    %v253 = vld [vmem:[%s240 + $0x60] sm:$0xff]
    %v254 = vld [vmem:[%s240 + $0x68] sm:$0xff]
    %v255 = vld [vmem:[%s240 + $0x70] sm:$0xff]
    %v256 = vld [vmem:[%s240 + $0x78] sm:$0xff]
    %s257 = scalar_lea.vmem %s2, 2
    %v258 = vld [vmem:[%s257] sm:$0x1]
    %v260 = vlaneseq
    %v261 = vshrl.u32 %v260, 7
    %v262 = vsub.s32 0, %v261
    %v263 = vrot.slane %v258, %v262
    %265 = vmatprep.subr.mxu0 0.0
    %266 = vmatpush1.msra.mxu0 %v241
    %267 = vmatprep.subr.mxu0 0.0
    %268 = vmatpush1.msra.mxu0 %v242
    %269 = vmatprep.subr.mxu0 0.0
    %270 = vmatpush1.msra.mxu0 %v243
    %271 = vmatprep.subr.mxu0 0.0
    %272 = vmatpush1.msra.mxu0 %v244
    %273 = vmatprep.subr.mxu0 0.0
    %274 = vmatpush1.msra.mxu0 %v245
    %275 = vmatprep.subr.mxu0 0.0
    %276 = vmatpush1.msra.mxu0 %v246
    %277 = vmatprep.subr.mxu0 0.0
    %278 = vmatpush1.msra.mxu0 %v247
    %279 = vmatprep.subr.mxu0 0.0
    %280 = vmatpush1.msra.mxu0 %v248
    %281 = vmatprep.subr.mxu0 0.0
    %282 = vmatpush1.msra.mxu0 %v249
    %283 = vmatprep.subr.mxu0 0.0
    %284 = vmatpush1.msra.mxu0 %v250
    %285 = vmatprep.subr.mxu0 0.0
    %286 = vmatpush1.msra.mxu0 %v251
    %287 = vmatprep.subr.mxu0 0.0
    %288 = vmatpush1.msra.mxu0 %v252
    %289 = vmatprep.subr.mxu0 0.0
    %290 = vmatpush1.msra.mxu0 %v253
    %291 = vmatprep.subr.mxu0 0.0
    %292 = vmatpush1.msra.mxu0 %v254
    %293 = vmatprep.subr.mxu0 0.0
    %294 = vmatpush1.msra.mxu0 %v255
    %295 = vmatprep.subr.mxu0 0.0
    %296 = vmatpush1.msra.mxu0 %v256
    %297 = vmatprep.subr.mxu0 0.0
    %298 = vmatpush1.msra.mxu0 0.0
    %299 = vmatprep.subr.mxu0 0.0
    %300 = vmatpush1.msra.mxu0 0.0
    %301 = vmatprep.subr.mxu0 0.0
    %302 = vmatpush1.msra.mxu0 0.0
    %303 = vmatprep.subr.mxu0 0.0
    %304 = vmatpush1.msra.mxu0 0.0
    %305 = vmatprep.subr.mxu0 0.0
    %306 = vmatpush1.msra.mxu0 0.0
    %307 = vmatprep.subr.mxu0 0.0
    %308 = vmatpush1.msra.mxu0 0.0
    %309 = vmatprep.subr.mxu0 0.0
    %310 = vmatpush1.msra.mxu0 0.0
    %311 = vmatprep.subr.mxu0 0.0
    %312 = vmatpush1.msra.mxu0 0.0
    %313 = vmatprep.subr.mxu0 0.0
    %314 = vmatpush1.msra.mxu0 0.0
    %315 = vmatprep.subr.mxu0 0.0
    %316 = vmatpush1.msra.mxu0 0.0
    %317 = vmatprep.subr.mxu0 0.0
    %318 = vmatpush1.msra.mxu0 0.0
    %319 = vmatprep.subr.mxu0 0.0
    %320 = vmatpush1.msra.mxu0 0.0
    %321 = vmatprep.subr.mxu0 0.0
    %322 = vmatpush1.msra.mxu0 0.0
    %323 = vmatprep.subr.mxu0 0.0
    %324 = vmatpush1.msra.mxu0 0.0
    %325 = vmatprep.subr.mxu0 0.0
    %326 = vmatpush1.msra.mxu0 0.0
    %327 = vmatprep.subr.mxu0 0.0
    %328 = vmatpush1.msra.mxu0 0.0
    %329 = vmatprep.mubr.f32.mxu0 0.0
    %330 = vmatmul.mubr.f32.gmra.mrb[0].mxu0 %v239
    %v331 = vpop.f32.mrb[0].mxu0
    %v332 = vadd.f32 %v263, %v331
    %v333 = vpop.f32.mrb[0].mxu0
    %334 = vdwg.mxu0
    %v335 = vsub.f32 0.0, %v332
    %v336 = vmul.f32 %v335, 1.442695
    %v337 = vpow.pop %v336
    %v338 = vadd.f32 %v337, 1.0
    %v339 = vrcp.pop %v338
    %s340 = scalar_lea.vmem [#allocation5], 384
    %v341 = vld [vmem:[%s340] sm:$0xff]
    %v342 = vld [vmem:[%s340 + $0x8] sm:$0xff]
    %v343 = vld [vmem:[%s340 + $0x10] sm:$0xff]
    %v344 = vld [vmem:[%s340 + $0x18] sm:$0xff]
    %v345 = vld [vmem:[%s340 + $0x20] sm:$0xff]
    %v346 = vld [vmem:[%s340 + $0x28] sm:$0xff]
    %v347 = vld [vmem:[%s340 + $0x30] sm:$0xff]
    %v348 = vld [vmem:[%s340 + $0x38] sm:$0xff]
    %v349 = vld [vmem:[%s340 + $0x40] sm:$0xff]
    %v350 = vld [vmem:[%s340 + $0x48] sm:$0xff]
    %v351 = vld [vmem:[%s340 + $0x50] sm:$0xff]
    %v352 = vld [vmem:[%s340 + $0x58] sm:$0xff]
    %v353 = vld [vmem:[%s340 + $0x60] sm:$0xff]
    %v354 = vld [vmem:[%s340 + $0x68] sm:$0xff]
    %v355 = vld [vmem:[%s340 + $0x70] sm:$0xff]
    %v356 = vld [vmem:[%s340 + $0x78] sm:$0xff]
    %s357 = scalar_lea.vmem %s2, 3
    %v358 = vld [vmem:[%s357] sm:$0x1]
    %v360 = vlaneseq
    %v361 = vshrl.u32 %v360, 7
    %v362 = vsub.s32 0, %v361
    %v363 = vrot.slane %v358, %v362
    %365 = vmatprep.subr.mxu0 0.0
    %366 = vmatpush1.msra.mxu0 %v341
    %367 = vmatprep.subr.mxu0 0.0
    %368 = vmatpush1.msra.mxu0 %v342
    %369 = vmatprep.subr.mxu0 0.0
    %370 = vmatpush1.msra.mxu0 %v343
    %371 = vmatprep.subr.mxu0 0.0
    %372 = vmatpush1.msra.mxu0 %v344
    %373 = vmatprep.subr.mxu0 0.0
    %374 = vmatpush1.msra.mxu0 %v345
    %375 = vmatprep.subr.mxu0 0.0
    %376 = vmatpush1.msra.mxu0 %v346
    %377 = vmatprep.subr.mxu0 0.0
    %378 = vmatpush1.msra.mxu0 %v347
    %379 = vmatprep.subr.mxu0 0.0
    %380 = vmatpush1.msra.mxu0 %v348
    %381 = vmatprep.subr.mxu0 0.0
    %382 = vmatpush1.msra.mxu0 %v349
    %383 = vmatprep.subr.mxu0 0.0
    %384 = vmatpush1.msra.mxu0 %v350
    %385 = vmatprep.subr.mxu0 0.0
    %386 = vmatpush1.msra.mxu0 %v351
    %387 = vmatprep.subr.mxu0 0.0
    %388 = vmatpush1.msra.mxu0 %v352
    %389 = vmatprep.subr.mxu0 0.0
    %390 = vmatpush1.msra.mxu0 %v353
    %391 = vmatprep.subr.mxu0 0.0
    %392 = vmatpush1.msra.mxu0 %v354
    %393 = vmatprep.subr.mxu0 0.0
    %394 = vmatpush1.msra.mxu0 %v355
    %395 = vmatprep.subr.mxu0 0.0
    %396 = vmatpush1.msra.mxu0 %v356
    %397 = vmatprep.subr.mxu0 0.0
    %398 = vmatpush1.msra.mxu0 0.0
    %399 = vmatprep.subr.mxu0 0.0
    %400 = vmatpush1.msra.mxu0 0.0
    %401 = vmatprep.subr.mxu0 0.0
    %402 = vmatpush1.msra.mxu0 0.0
    %403 = vmatprep.subr.mxu0 0.0
    %404 = vmatpush1.msra.mxu0 0.0
    %405 = vmatprep.subr.mxu0 0.0
    %406 = vmatpush1.msra.mxu0 0.0
    %407 = vmatprep.subr.mxu0 0.0
    %408 = vmatpush1.msra.mxu0 0.0
    %409 = vmatprep.subr.mxu0 0.0
    %410 = vmatpush1.msra.mxu0 0.0
    %411 = vmatprep.subr.mxu0 0.0
    %412 = vmatpush1.msra.mxu0 0.0
    %413 = vmatprep.subr.mxu0 0.0
    %414 = vmatpush1.msra.mxu0 0.0
    %415 = vmatprep.subr.mxu0 0.0
    %416 = vmatpush1.msra.mxu0 0.0
    %417 = vmatprep.subr.mxu0 0.0
    %418 = vmatpush1.msra.mxu0 0.0
    %419 = vmatprep.subr.mxu0 0.0
    %420 = vmatpush1.msra.mxu0 0.0
    %421 = vmatprep.subr.mxu0 0.0
    %422 = vmatpush1.msra.mxu0 0.0
    %423 = vmatprep.subr.mxu0 0.0
    %424 = vmatpush1.msra.mxu0 0.0
    %425 = vmatprep.subr.mxu0 0.0
    %426 = vmatpush1.msra.mxu0 0.0
    %427 = vmatprep.subr.mxu0 0.0
    %428 = vmatpush1.msra.mxu0 0.0
    %429 = vmatprep.mubr.f32.mxu0 0.0
    %430 = vmatmul.mubr.f32.gmra.mrb[0].mxu0 %v339
    %v431 = vpop.f32.mrb[0].mxu0
    %v432 = vadd.f32 %v363, %v431
    %v433 = vpop.f32.mrb[0].mxu0
    %434 = vdwg.mxu0
    %435 = vst [vmem:[#allocation7] sm:$0xff] %v432
    // Predicated region
    $region22: #{tpu_custom_call.1} parent=1 // pred_check
      _
    $region23: #{tpu_custom_call.1} parent=1 // pred_check_branch
      %437 = sbr.rel (0) target = $region25
    $region24: #{tpu_custom_call.1} parent=1 // pred_region
      %s439 = ssub.s32 128, 128
      %440 = vsyncadd [#allocation4], %s439
      %s442 = sshll.u32 [#allocation7], 4
      %s443 = int_to_ptr.vmem [resolvable:$true] %s442
      %445 = dma.vmem_to_hbm [thread:$0]  %s443, 128, %s3, [#allocation4]
    $region25: #{tpu_custom_call.1} parent=1 // pred_fallthru
      _
    // Predicated region
    $region26: #{tpu_custom_call.1} parent=1 // pred_check
      _
    $region27: #{tpu_custom_call.1} parent=1 // pred_check_branch
      %447 = sbr.rel (0) target = $region29
    $region28: #{tpu_custom_call.1} parent=1 // pred_region
      %448 = dma.done [#allocation4], 128
    $region29: #{tpu_custom_call.1} parent=1 // pred_fallthru
      _
    %449 = vsyncpa [#allocation3], 1
    %450 = vsyncpa [#allocation6], 1
    %451 = vsyncpa [#allocation4], 1

</llo_original>
